<compile_context>
chip_gen: v5e
topology: v5e:2x2
jax: 0.10.0
libtpu: 0.0.40
codegen_flags: <defaults>
</compile_context>

<pallas_src>
import jax
import jax.numpy as jnp
from jax.experimental import pallas as pl
from jax.experimental.pallas import tpu as pltpu

_MiB = 1024 * 1024


def residual_dense_kernel(x_ref, w_ref, b_ref, o_ref):
    # x_ref: [TM, H] (input dtype)      w_ref: [H, H] (bf16 compute dtype)
    # b_ref: [1, H]  (f32, resident)    o_ref: [TM, H]
    x = x_ref[...]
    # fn(x) = x @ W + b: bf16 operands on the MXU, f32 accumulation.
    y = jnp.dot(x.astype(w_ref.dtype), w_ref[...],
                preferred_element_type=jnp.float32)
    # Fused residual + bias add in f32 (VPU work rides free under MXU/store slots).
    o_ref[...] = (y + b_ref[...] + x.astype(jnp.float32)).astype(o_ref.dtype)


def _sublane_for(dtype) -> int:
    itemsize = jnp.dtype(dtype).itemsize
    if itemsize == 4:
        return 8
    if itemsize == 2:
        return 16
    return 32


def _vmem_capacity_bytes() -> int:
    """Per-TensorCore VMEM capacity; conservative fallback if the query fails."""
    try:
        cap = int(getattr(pltpu.get_tpu_info(), "vmem_capacity_bytes", 0))
        if cap > 0:
            return cap
    except Exception:
        pass
    return 64 * _MiB  # v7x per-TC size — the smallest across v5e/v6e/v7x


def residual_dense(x, w, b, *, x_tile_target_bytes=4 * _MiB):
    """out = x @ w + b + x in a single Pallas TPU kernel.

    x: [B, S, H], w: [H, H], b: [H]
    """
    B, S, H = x.shape
    M = B * S
    x2 = x.reshape(M, H)                       # free reshape (leading dims only)

    x_itemsize = jnp.dtype(x.dtype).itemsize
    sublane = _sublane_for(x.dtype)

    # MXU is bf16-native on v5e/v6e/v7x; f32 matmul is a slow multi-pass
    # emulation. Cast W once in the wrapper (one-time op, halves residency).
    w_c = w.astype(jnp.bfloat16) if jnp.dtype(w.dtype) == jnp.float32 else w
    b2 = b.astype(jnp.float32).reshape(1, H)   # hoist bias cast out of kernel

    # --- generation-aware VMEM budget (per TensorCore) ----------------------
    # Resident W (single-buffered) + resident bias + 2x double-buffered x tiles
    # + 2x double-buffered out tiles.
    vmem_cap = _vmem_capacity_bytes()                    # 128 MiB v5e/v6e, 64 MiB v7x
    budget = min(vmem_cap - 12 * _MiB, 100 * _MiB)       # headroom for Mosaic scratch
    w_bytes = H * H * jnp.dtype(w_c.dtype).itemsize
    b_bytes = 8 * max(H, 128) * 4                        # (1,H) f32 padded to (8,128)
    # TODO(synk): if W alone exceeds the budget (very large H, esp. on v7x's
    # 64 MiB), add K/N tiling of W with an f32 VMEM accumulator instead of a
    # fully resident W; not needed for the hidden sizes exercised here.
    per_row_tile_bytes = 4 * H * x_itemsize              # 2 x-bufs + 2 out-bufs per row
    tile_budget = max(budget - w_bytes - b_bytes, sublane * per_row_tile_bytes)

    # --- choose TM -----------------------------------------------------------
    tm = min(x_tile_target_bytes // (H * x_itemsize),    # ~4 MiB x tile
             tile_budget // per_row_tile_bytes)          # stay inside VMEM budget
    m_rounded = ((M + sublane - 1) // sublane) * sublane
    tm = max(sublane, min(tm, m_rounded))
    row_gran = 256                                       # MXU row granularity (v6e/v7x)
    if tm >= row_gran:
        tm = (tm // row_gran) * row_gran                 # keep vmatmul cadence full
    else:
        tm = max(sublane, (tm // sublane) * sublane)
    # v7x megacore: if everything collapsed into one tile but there is enough
    # work, split it so the "parallel" M axis spans both TensorCores.
    if tm >= m_rounded and m_rounded >= 2 * row_gran:
        tm = max(row_gran, ((m_rounded // 2) // row_gran) * row_gran)

    # No wrapper-side pad/slice copies: the ragged last block (if any) is
    # masked by Pallas; garbage tail rows never reach HBM.
    grid = (pl.cdiv(M, tm),)

    vmem_needed = w_bytes + b_bytes + tm * per_row_tile_bytes
    vmem_limit = int(min(vmem_cap - 8 * _MiB, max(vmem_needed + 8 * _MiB, 32 * _MiB)))

    cost = pl.CostEstimate(
        flops=2 * M * H * H,
        transcendentals=0,
        bytes_accessed=2 * M * H * x_itemsize            # x in + out
        + w_bytes + H * 4,                               # resident W + bias
    )

    # TODO(synk): for H < 128 the output last dim is lane-sparse (masked
    # vst.msk stores); a production path should pad H to 128 in a kernel-side
    # view — skipped here since the demo H=32 is demo-scale only.

    def _call(single_buffer_resident):
        resident_kw = (dict(pipeline_mode=pl.Buffered(buffer_count=1))
                       if single_buffer_resident else {})
        return pl.pallas_call(
            residual_dense_kernel,
            out_shape=jax.ShapeDtypeStruct((M, H), x.dtype),
            grid=grid,
            in_specs=[
                pl.BlockSpec((tm, H), lambda i: (i, 0)),                 # x (pipelined)
                pl.BlockSpec((H, H), lambda i: (0, 0), **resident_kw),   # W (resident)
                pl.BlockSpec((1, H), lambda i: (0, 0), **resident_kw),   # bias (resident)
            ],
            out_specs=pl.BlockSpec((tm, H), lambda i: (i, 0)),
            compiler_params=pltpu.CompilerParams(
                dimension_semantics=("parallel",),                       # megacore on v7x
                vmem_limit_bytes=vmem_limit,
            ),
            cost_estimate=cost,
        )(x2, w_c, b2)

    try:
        # Constant index map => no re-DMA of W/bias; single-buffer them so the
        # saved VMEM goes to larger x/out tiles.
        out2 = _call(True)
    except Exception:
        # Fallback for JAX versions without BlockSpec.pipeline_mode support.
        out2 = _call(False)

    return out2.reshape(B, S, H)


if __name__ == "__main__":
    # small shapes consistent with Residual wrapping a Linear(hidden -> hidden)
    B, S, H = 2, 8, 32
    key = jax.random.PRNGKey(0)
    kx, kw, kb = jax.random.split(key, 3)

    x = jax.random.normal(kx, (B, S, H), dtype=jnp.float32)
    # deterministic xavier-normal-like init for the wrapped Linear
    w = jax.random.normal(kw, (H, H), dtype=jnp.float32) * (2.0 / (H + H)) ** 0.5
    b = jax.random.normal(kb, (H,), dtype=jnp.float32) * 0.01

    out = residual_dense(x, w, b)
    jax.block_until_ready(out)

    # reference: fn(x) + x in plain JAX (f32).  The kernel runs the matmul with
    # bf16 operands on the MXU (f32 accumulate), so use a bf16-level tolerance.
    ref = jnp.einsum("bsh,hk->bsk", x, w) + b + x
    assert jnp.allclose(out, ref, atol=5e-2, rtol=5e-2), "mismatch vs reference"

    print("KERNEL_OK")
</pallas_src>

<mosaic_0001>
module attributes {stable_mosaic.version = 11 : i64} {
  func.func @residual_dense_kernel(%arg0: i32, %arg1: memref<16x32xf32, #tpu.memory_space<vmem>>, %arg2: memref<32x32xbf16, #tpu.memory_space<vmem>>, %arg3: memref<1x32xf32, #tpu.memory_space<vmem>>, %arg4: memref<16x32xf32, #tpu.memory_space<vmem>>) attributes {dimension_semantics = [#tpu.dimension_semantics<parallel>], iteration_bounds = array<i64: 1>, scalar_prefetch = 0 : i64, scratch_operands = 0 : i64, tpu.core_type = #tpu.core_type<tc>, window_params = [{transform_indices = @transform_0, window_bounds = array<i64: 16, 32>}, {pipeline_mode = #tpu.pipeline_mode<synchronous>, transform_indices = @transform_1, window_bounds = array<i64: 32, 32>}, {pipeline_mode = #tpu.pipeline_mode<synchronous>, transform_indices = @transform_2, window_bounds = array<i64: 1, 32>}, {transform_indices = @transform_3, window_bounds = array<i64: 16, 32>}]} {
    %c0 = arith.constant 0 : index
    %c0_0 = arith.constant 0 : index
    %0 = vector.load %arg1[%c0, %c0_0] : memref<16x32xf32, #tpu.memory_space<vmem>>, vector<16x32xf32>
    %1 = arith.truncf %0 : vector<16x32xf32> to vector<16x32xbf16>
    %c0_1 = arith.constant 0 : index
    %c0_2 = arith.constant 0 : index
    %2 = vector.load %arg2[%c0_1, %c0_2] : memref<32x32xbf16, #tpu.memory_space<vmem>>, vector<32x32xbf16>
    %cst = arith.constant dense<0.000000e+00> : vector<16x32xf32>
    %3 = tpu.matmul %1, %2, %cst {dimension_numbers = #tpu.dot_dimension_numbers<[1], [0], [0], [1], [0, 0, 1, 1], [], []>} : vector<16x32xbf16>, vector<32x32xbf16>, vector<16x32xf32> -> vector<16x32xf32>
    %c0_3 = arith.constant 0 : index
    %c0_4 = arith.constant 0 : index
    %4 = vector.load %arg3[%c0_3, %c0_4] : memref<1x32xf32, #tpu.memory_space<vmem>>, vector<1x32xf32>
    %5 = vector.broadcast %4 : vector<1x32xf32> to vector<16x32xf32>
    %6 = arith.addf %3, %5 : vector<16x32xf32>
    %7 = arith.addf %6, %0 : vector<16x32xf32>
    %c0_5 = arith.constant 0 : index
    %c0_6 = arith.constant 0 : index
    %8 = vector.load %arg4[%c0_5, %c0_6] : memref<16x32xf32, #tpu.memory_space<vmem>>, vector<16x32xf32>
    tpu.vector_store %arg4[%c0_5, %c0_6], %7 {strides = array<i32>} : memref<16x32xf32, #tpu.memory_space<vmem>>, vector<16x32xf32>,
    return
  }
  func.func @transform_0(%arg0: i32) -> (i32, i32) {
    %c0_i32 = arith.constant 0 : i32
    %c0_i32_0 = arith.constant 0 : i32
    return %arg0, %c0_i32 : i32, i32
  }
  func.func @transform_1(%arg0: i32) -> (i32, i32) {
    %c0_i32 = arith.constant 0 : i32
    %c0_i32_0 = arith.constant 0 : i32
    %c0_i32_1 = arith.constant 0 : i32
    return %c0_i32, %c0_i32_0 : i32, i32
  }
  func.func @transform_2(%arg0: i32) -> (i32, i32) {
    %c0_i32 = arith.constant 0 : i32
    %c0_i32_0 = arith.constant 0 : i32
    %c0_i32_1 = arith.constant 0 : i32
    return %c0_i32, %c0_i32_0 : i32, i32
  }
  func.func @transform_3(%arg0: i32) -> (i32, i32) {
    %c0_i32 = arith.constant 0 : i32
    %c0_i32_0 = arith.constant 0 : i32
    return %arg0, %c0_i32 : i32, i32
  }
}

module attributes {stable_mosaic.version = 11 : i64} {
  func.func @residual_dense_kernel(%arg0: i32, %arg1: memref<16x32xf32, #tpu.memory_space<vmem>>, %arg2: memref<32x32xbf16, #tpu.memory_space<vmem>>, %arg3: memref<1x32xf32, #tpu.memory_space<vmem>>, %arg4: memref<16x32xf32, #tpu.memory_space<vmem>>) attributes {dimension_semantics = [#tpu.dimension_semantics<parallel>], iteration_bounds = array<i64: 1>, scalar_prefetch = 0 : i64, scratch_operands = 0 : i64, tpu.core_type = #tpu.core_type<tc>, window_params = [{transform_indices = @transform_0, window_bounds = array<i64: 16, 32>}, {pipeline_mode = #tpu.pipeline_mode<synchronous>, transform_indices = @transform_1, window_bounds = array<i64: 32, 32>}, {pipeline_mode = #tpu.pipeline_mode<synchronous>, transform_indices = @transform_2, window_bounds = array<i64: 1, 32>}, {transform_indices = @transform_3, window_bounds = array<i64: 16, 32>}]} {
    %c0 = arith.constant 0 : index
    %c0_0 = arith.constant 0 : index
    %0 = vector.load %arg1[%c0, %c0_0] : memref<16x32xf32, #tpu.memory_space<vmem>>, vector<16x32xf32>
    %1 = arith.truncf %0 : vector<16x32xf32> to vector<16x32xbf16>
    %c0_1 = arith.constant 0 : index
    %c0_2 = arith.constant 0 : index
    %2 = vector.load %arg2[%c0_1, %c0_2] : memref<32x32xbf16, #tpu.memory_space<vmem>>, vector<32x32xbf16>
    %cst = arith.constant dense<0.000000e+00> : vector<16x32xf32>
    %3 = tpu.matmul %1, %2, %cst {dimension_numbers = #tpu.dot_dimension_numbers<[1], [0], [0], [1], [0, 0, 1, 1], [], []>} : vector<16x32xbf16>, vector<32x32xbf16>, vector<16x32xf32> -> vector<16x32xf32>
    %c0_3 = arith.constant 0 : index
    %c0_4 = arith.constant 0 : index
    %4 = vector.load %arg3[%c0_3, %c0_4] : memref<1x32xf32, #tpu.memory_space<vmem>>, vector<1x32xf32>
    %5 = vector.broadcast %4 : vector<1x32xf32> to vector<16x32xf32>
    %6 = arith.addf %3, %5 : vector<16x32xf32>
    %7 = arith.addf %6, %0 : vector<16x32xf32>
    %c0_5 = arith.constant 0 : index
    %c0_6 = arith.constant 0 : index
    %8 = vector.load %arg4[%c0_5, %c0_6] : memref<16x32xf32, #tpu.memory_space<vmem>>, vector<16x32xf32>
    tpu.vector_store %arg4[%c0_5, %c0_6], %7 {strides = array<i32>} : memref<16x32xf32, #tpu.memory_space<vmem>>, vector<16x32xf32>,
    return
  }
  func.func @transform_0(%arg0: i32) -> (i32, i32) {
    %c0_i32 = arith.constant 0 : i32
    %c0_i32_0 = arith.constant 0 : i32
    return %arg0, %c0_i32 : i32, i32
  }
  func.func @transform_1(%arg0: i32) -> (i32, i32) {
    %c0_i32 = arith.constant 0 : i32
    %c0_i32_0 = arith.constant 0 : i32
    %c0_i32_1 = arith.constant 0 : i32
    return %c0_i32, %c0_i32_0 : i32, i32
  }
  func.func @transform_2(%arg0: i32) -> (i32, i32) {
    %c0_i32 = arith.constant 0 : i32
    %c0_i32_0 = arith.constant 0 : i32
    %c0_i32_1 = arith.constant 0 : i32
    return %c0_i32, %c0_i32_0 : i32, i32
  }
  func.func @transform_3(%arg0: i32) -> (i32, i32) {
    %c0_i32 = arith.constant 0 : i32
    %c0_i32_0 = arith.constant 0 : i32
    return %arg0, %c0_i32 : i32, i32
  }
}

</mosaic_0001>

<llo_original>
// kernel: tpu_custom_call.1
$region0: #{tpu_custom_call.1}
  #allocation0 [shape = 'u32[]', space=smem, size = 0x4, offset = 0x4, fixed_abs, tag = 'smem constant byte address 0x4 - core index']
  #allocation1 [shape = 'u32[72,128]{1,0:T(1,128)}', space=vmem, size = 0x9000, scoped, tag = 'internal scratch']
  %s0 = inlined_call_operand.hbm [shape: f32[16,32], index: 0, kind: input, shape index: {}]
  %s1 = inlined_call_operand.hbm [shape: bf16[32,32], index: 1, kind: input, shape index: {}]
  %s2 = inlined_call_operand.vmem [shape: f32[1,32], index: 2, kind: input, shape index: {}]
  %s3 = inlined_call_operand.hbm [shape: f32[16,32], index: 3, kind: output, shape index: {}]
  %s4 = sld [smem:[#allocation0]]
  $region30: #{tpu_custom_call.1} parent=0
    _
  %s6 = ssub.s32 1, %s4
  %s7 = scalar_select 0, %s6, %s4
  $region1: #{tpu_custom_call.1} parent=0
    #allocation2 [shape = 'u8[8192]{0}', space=vmem, size = 0x2000, scoped, tag = 'input window, operand 0, single buffered']
    #allocation3 [shape = 's32[1]{0}', space=sflag, size = 0x4, scoped, tag = 'scoped memory for tpu_custom_call.1']
    #allocation4 [shape = 's32[1]{0}', space=sflag, size = 0x4, scoped, tag = 'scoped memory for tpu_custom_call.1']
    #allocation5 [shape = 'u8[8192]{0}', space=vmem, size = 0x2000, scoped, tag = 'input window, operand 1, single buffered']
    #allocation6 [shape = 's32[1]{0}', space=sflag, size = 0x4, scoped, tag = 'scoped memory for tpu_custom_call.1']
    #allocation7 [shape = 'u8[8192]{0}', space=vmem, size = 0x2000, scoped, tag = 'output window, operand 0, single buffered']
    %8 = vsyncpa [#allocation3], 0
    %9 = vsyncpa [#allocation6], 0
    %10 = vsyncpa [#allocation4], 0
    // Predicated region
    $region2: #{tpu_custom_call.1} parent=1 // pred_check
      _
    $region3: #{tpu_custom_call.1} parent=1 // pred_check_branch
      %12 = sbr.rel (0) target = $region5
    $region4: #{tpu_custom_call.1} parent=1 // pred_region
      %14 = vsyncadd [#allocation3], 0
      %s15 = sshll.u32 %s0, 4
      %s16 = int_to_ptr.hbm [resolvable:$true] %s15
      %s17 = sshll.u32 [#allocation2], 4
      %s18 = int_to_ptr.vmem [resolvable:$true] %s17
      %23 = dma.hbm_to_vmem [thread:$0]  %s16, 256, %s18, [#allocation3], 128, 128, 8
    $region5: #{tpu_custom_call.1} parent=1 // pred_fallthru
      _
    // Predicated region
    $region6: #{tpu_custom_call.1} parent=1 // pred_check
      _
    $region7: #{tpu_custom_call.1} parent=1 // pred_check_branch
      %25 = sbr.rel (0) target = $region9
    $region8: #{tpu_custom_call.1} parent=1 // pred_region
      %27 = vsyncadd [#allocation6], 0
      %s28 = sshll.u32 %s1, 4
      %s29 = int_to_ptr.hbm [resolvable:$true] %s28
      %s30 = sshll.u32 [#allocation5], 4
      %s31 = int_to_ptr.vmem [resolvable:$true] %s30
      %36 = dma.hbm_to_vmem [thread:$0]  %s29, 256, %s31, [#allocation6], 64, 64, 4
    $region9: #{tpu_custom_call.1} parent=1 // pred_fallthru
      _
    // Predicated region
    $region10: #{tpu_custom_call.1} parent=1 // pred_check
      _
    $region11: #{tpu_custom_call.1} parent=1 // pred_check_branch
      %38 = sbr.rel (0) target = $region13
    $region12: #{tpu_custom_call.1} parent=1 // pred_region
      _
    $region13: #{tpu_custom_call.1} parent=1 // pred_fallthru
      _
    // Predicated region
    $region14: #{tpu_custom_call.1} parent=1 // pred_check
      _
    $region15: #{tpu_custom_call.1} parent=1 // pred_check_branch
      %40 = sbr.rel (0) target = $region17
    $region16: #{tpu_custom_call.1} parent=1 // pred_region
      %42 = dma.done [#allocation3], 256
    $region17: #{tpu_custom_call.1} parent=1 // pred_fallthru
      _
    // Predicated region
    $region18: #{tpu_custom_call.1} parent=1 // pred_check
      _
    $region19: #{tpu_custom_call.1} parent=1 // pred_check_branch
      %44 = sbr.rel (0) target = $region21
    $region20: #{tpu_custom_call.1} parent=1 // pred_region
      %46 = dma.done [#allocation6], 256
    $region21: #{tpu_custom_call.1} parent=1 // pred_fallthru
      _
    %v48 = vld [vmem:[#allocation2] sm:$0xff]
    %v49 = vld [vmem:[#allocation2 + $0x8] sm:$0xff]
    %v50 = vpack.c.bf16 %v49, %v48
    %v51 = vld [vmem:[#allocation5] sm:$0xf]
    %v52 = vld [vmem:[#allocation5 + $0x4] sm:$0xf]
    %v53 = vld [vmem:[#allocation5 + $0x8] sm:$0xf]
    %v54 = vld [vmem:[#allocation5 + $0xc] sm:$0xf]
    %v55 = vld [vmem:[%s2] sm:$0x1]
    %v57 = vperm.slane %v55, 0
    %v63 = vunpack.c.l.b16 %v51
    %v64 = vunpack.c.l.b16 %v52
    %v65 = vunpack.c.l.b16 %v53
    %v66 = vunpack.c.l.b16 %v54
    %v67 = vpack.c.b16 %v64, %v63
    %v68 = vpack.c.b16 %v66, %v65
    %vm71 = vcmask 261120
    %v73 = vsel %vm71, %v50, 0
    %75 = vmatpush.bf16.msra.mxu0 0
    %76 = vmatpush.bf16.msra.mxu0 0
    %77 = vmatpush.bf16.msra.mxu0 0
    %78 = vmatpush.bf16.msra.mxu0 0
    %79 = vmatpush.bf16.msra.mxu0 0
    %80 = vmatpush.bf16.msra.mxu0 0
    %81 = vmatpush.bf16.msra.mxu0 %v68
    %82 = vmatpush.bf16.msra.mxu0 %v67
    %83 = vmatmul.bf16.gmra.mxu0 %v73
    %v84 = vpop.f32.mrf.mxu0
    %v85 = vadd.f32 %v57, %v84
    %v86 = vpop.f32.mrf.mxu0
    %v87 = vadd.f32 %v57, %v86
    %88 = vdwg.mxu0
    %v89 = vadd.f32 %v85, %v48
    %v90 = vadd.f32 %v87, %v49
    %91 = vst.msk [vmem:[#allocation7] sm:$0xff] %vm71, %v89
    %92 = vst.msk [vmem:[#allocation7 + $0x8] sm:$0xff] %vm71, %v90
    // Predicated region
    $region22: #{tpu_custom_call.1} parent=1 // pred_check
      _
    $region23: #{tpu_custom_call.1} parent=1 // pred_check_branch
      %94 = sbr.rel (0) target = $region25
    $region24: #{tpu_custom_call.1} parent=1 // pred_region
      %96 = vsyncadd [#allocation4], 0
      %s97 = sshll.u32 [#allocation7], 4
      %s98 = int_to_ptr.vmem [resolvable:$true] %s97
      %s99 = sshll.u32 %s3, 4
      %s100 = int_to_ptr.hbm [resolvable:$true] %s99
      %105 = dma.vmem_to_hbm [thread:$0]  %s98, 256, %s100, [#allocation4], 128, 128, 8
    $region25: #{tpu_custom_call.1} parent=1 // pred_fallthru
      _
    // Predicated region
    $region26: #{tpu_custom_call.1} parent=1 // pred_check
      _
    $region27: #{tpu_custom_call.1} parent=1 // pred_check_branch
      %107 = sbr.rel (0) target = $region29
    $region28: #{tpu_custom_call.1} parent=1 // pred_region
      %109 = dma.done [#allocation4], 256
    $region29: #{tpu_custom_call.1} parent=1 // pred_fallthru
      _
    %110 = vsyncpa [#allocation3], 1
    %111 = vsyncpa [#allocation6], 1
    %112 = vsyncpa [#allocation4], 1

// kernel: tpu_custom_call.1
$region0: #{tpu_custom_call.1}
  #allocation0 [shape = 'u32[]', space=smem, size = 0x4, offset = 0x4, fixed_abs, tag = 'smem constant byte address 0x4 - core index']
  #allocation1 [shape = 'u32[72,128]{1,0:T(1,128)}', space=vmem, size = 0x9000, scoped, tag = 'internal scratch']
  %s0 = inlined_call_operand.hbm [shape: f32[16,32], index: 0, kind: input, shape index: {}]
  %s1 = inlined_call_operand.hbm [shape: bf16[32,32], index: 1, kind: input, shape index: {}]
  %s2 = inlined_call_operand.vmem [shape: f32[1,32], index: 2, kind: input, shape index: {}]
  %s3 = inlined_call_operand.hbm [shape: f32[16,32], index: 3, kind: output, shape index: {}]
  %s4 = sld [smem:[#allocation0]]
  $region30: #{tpu_custom_call.1} parent=0
    _
  %s6 = ssub.s32 1, %s4
  %s7 = scalar_select 0, %s6, %s4
  $region1: #{tpu_custom_call.1} parent=0
    #allocation2 [shape = 'u8[8192]{0}', space=vmem, size = 0x2000, scoped, tag = 'input window, operand 0, single buffered']
    #allocation3 [shape = 's32[1]{0}', space=sflag, size = 0x4, scoped, tag = 'scoped memory for tpu_custom_call.1']
    #allocation4 [shape = 's32[1]{0}', space=sflag, size = 0x4, scoped, tag = 'scoped memory for tpu_custom_call.1']
    #allocation5 [shape = 'u8[8192]{0}', space=vmem, size = 0x2000, scoped, tag = 'input window, operand 1, single buffered']
    #allocation6 [shape = 's32[1]{0}', space=sflag, size = 0x4, scoped, tag = 'scoped memory for tpu_custom_call.1']
    #allocation7 [shape = 'u8[8192]{0}', space=vmem, size = 0x2000, scoped, tag = 'output window, operand 0, single buffered']
    %8 = vsyncpa [#allocation3], 0
    %9 = vsyncpa [#allocation6], 0
    %10 = vsyncpa [#allocation4], 0
    // Predicated region
    $region2: #{tpu_custom_call.1} parent=1 // pred_check
      _
    $region3: #{tpu_custom_call.1} parent=1 // pred_check_branch
      %12 = sbr.rel (0) target = $region5
    $region4: #{tpu_custom_call.1} parent=1 // pred_region
      %14 = vsyncadd [#allocation3], 0
      %s15 = sshll.u32 %s0, 4
      %s16 = int_to_ptr.hbm [resolvable:$true] %s15
      %s17 = sshll.u32 [#allocation2], 4
      %s18 = int_to_ptr.vmem [resolvable:$true] %s17
      %23 = dma.hbm_to_vmem [thread:$0]  %s16, 256, %s18, [#allocation3], 128, 128, 8
    $region5: #{tpu_custom_call.1} parent=1 // pred_fallthru
      _
    // Predicated region
    $region6: #{tpu_custom_call.1} parent=1 // pred_check
      _
    $region7: #{tpu_custom_call.1} parent=1 // pred_check_branch
      %25 = sbr.rel (0) target = $region9
    $region8: #{tpu_custom_call.1} parent=1 // pred_region
      %27 = vsyncadd [#allocation6], 0
      %s28 = sshll.u32 %s1, 4
      %s29 = int_to_ptr.hbm [resolvable:$true] %s28
      %s30 = sshll.u32 [#allocation5], 4
      %s31 = int_to_ptr.vmem [resolvable:$true] %s30
      %36 = dma.hbm_to_vmem [thread:$0]  %s29, 256, %s31, [#allocation6], 64, 64, 4
    $region9: #{tpu_custom_call.1} parent=1 // pred_fallthru
      _
    // Predicated region
    $region10: #{tpu_custom_call.1} parent=1 // pred_check
      _
    $region11: #{tpu_custom_call.1} parent=1 // pred_check_branch
      %38 = sbr.rel (0) target = $region13
    $region12: #{tpu_custom_call.1} parent=1 // pred_region
      _
    $region13: #{tpu_custom_call.1} parent=1 // pred_fallthru
      _
    // Predicated region
    $region14: #{tpu_custom_call.1} parent=1 // pred_check
      _
    $region15: #{tpu_custom_call.1} parent=1 // pred_check_branch
      %40 = sbr.rel (0) target = $region17
    $region16: #{tpu_custom_call.1} parent=1 // pred_region
      %42 = dma.done [#allocation3], 256
    $region17: #{tpu_custom_call.1} parent=1 // pred_fallthru
      _
    // Predicated region
    $region18: #{tpu_custom_call.1} parent=1 // pred_check
      _
    $region19: #{tpu_custom_call.1} parent=1 // pred_check_branch
      %44 = sbr.rel (0) target = $region21
    $region20: #{tpu_custom_call.1} parent=1 // pred_region
      %46 = dma.done [#allocation6], 256
    $region21: #{tpu_custom_call.1} parent=1 // pred_fallthru
      _
    %v48 = vld [vmem:[#allocation2] sm:$0xff]
    %v49 = vld [vmem:[#allocation2 + $0x8] sm:$0xff]
    %v50 = vpack.c.bf16 %v49, %v48
    %v51 = vld [vmem:[#allocation5] sm:$0xf]
    %v52 = vld [vmem:[#allocation5 + $0x4] sm:$0xf]
    %v53 = vld [vmem:[#allocation5 + $0x8] sm:$0xf]
    %v54 = vld [vmem:[#allocation5 + $0xc] sm:$0xf]
    %v55 = vld [vmem:[%s2] sm:$0x1]
    %v57 = vperm.slane %v55, 0
    %v63 = vunpack.c.l.b16 %v51
    %v64 = vunpack.c.l.b16 %v52
    %v65 = vunpack.c.l.b16 %v53
    %v66 = vunpack.c.l.b16 %v54
    %v67 = vpack.c.b16 %v64, %v63
    %v68 = vpack.c.b16 %v66, %v65
    %vm71 = vcmask 261120
    %v73 = vsel %vm71, %v50, 0
    %75 = vmatpush.bf16.msra.mxu0 0
    %76 = vmatpush.bf16.msra.mxu0 0
    %77 = vmatpush.bf16.msra.mxu0 0
    %78 = vmatpush.bf16.msra.mxu0 0
    %79 = vmatpush.bf16.msra.mxu0 0
    %80 = vmatpush.bf16.msra.mxu0 0
    %81 = vmatpush.bf16.msra.mxu0 %v68
    %82 = vmatpush.bf16.msra.mxu0 %v67
    %83 = vmatmul.bf16.gmra.mxu0 %v73
    %v84 = vpop.f32.mrf.mxu0
    %v85 = vadd.f32 %v57, %v84
    %v86 = vpop.f32.mrf.mxu0
    %v87 = vadd.f32 %v57, %v86
    %88 = vdwg.mxu0
    %v89 = vadd.f32 %v85, %v48
    %v90 = vadd.f32 %v87, %v49
    %91 = vst.msk [vmem:[#allocation7] sm:$0xff] %vm71, %v89
    %92 = vst.msk [vmem:[#allocation7 + $0x8] sm:$0xff] %vm71, %v90
    // Predicated region
    $region22: #{tpu_custom_call.1} parent=1 // pred_check
      _
    $region23: #{tpu_custom_call.1} parent=1 // pred_check_branch
      %94 = sbr.rel (0) target = $region25
    $region24: #{tpu_custom_call.1} parent=1 // pred_region
      %96 = vsyncadd [#allocation4], 0
      %s97 = sshll.u32 [#allocation7], 4
      %s98 = int_to_ptr.vmem [resolvable:$true] %s97
      %s99 = sshll.u32 %s3, 4
      %s100 = int_to_ptr.hbm [resolvable:$true] %s99
      %105 = dma.vmem_to_hbm [thread:$0]  %s98, 256, %s100, [#allocation4], 128, 128, 8
    $region25: #{tpu_custom_call.1} parent=1 // pred_fallthru
      _
    // Predicated region
    $region26: #{tpu_custom_call.1} parent=1 // pred_check
      _
    $region27: #{tpu_custom_call.1} parent=1 // pred_check_branch
      %107 = sbr.rel (0) target = $region29
    $region28: #{tpu_custom_call.1} parent=1 // pred_region
      %109 = dma.done [#allocation4], 256
    $region29: #{tpu_custom_call.1} parent=1 // pred_fallthru
      _
    %110 = vsyncpa [#allocation3], 1
    %111 = vsyncpa [#allocation6], 1
    %112 = vsyncpa [#allocation4], 1

</llo_original>
